<compile_context>
chip_gen: v7x
topology: tpu7x:2x2x1
jax: 0.10.0
libtpu: 0.0.40
codegen_flags: <defaults>
</compile_context>

<pallas_src>
import functools

import jax
import jax.numpy as jnp
from jax import lax
from jax.experimental import pallas as pl
from jax.experimental.pallas import tpu as pltpu

P_DROP = 0.1
SCALE = 1.0 / 0.06   # folded into the query projection at prepare_params time


def attn_kernel(x1_ref, x2_ref, wq_ref, bq_ref, wkv_ref, bkv_ref, mask_ref, o_ref):
    H = x1_ref.shape[1]

    # q already carries the 1/0.06 scale (folded into wq/bq in the wrapper).
    q = jnp.dot(x1_ref[...], wq_ref[...], preferred_element_type=jnp.float32) + bq_ref[...]

    # Fused K/V projection: one (S2,H) x (H,2H) matmul, then static slices.
    kv = jnp.dot(x2_ref[...], wkv_ref[...], preferred_element_type=jnp.float32) + bkv_ref[...]
    k = kv[:, :H]
    v = kv[:, H:]

    # q · kᵀ without materializing k.T: contract on k's last dim.
    qk = lax.dot_general(q, k, dimension_numbers=(((1,), (1,)), ((), ())),
                         preferred_element_type=jnp.float32)

    # softmax along the last dim.
    m = jnp.max(qk, axis=-1, keepdims=True)
    e = jnp.exp(qk - m)
    denom = jnp.sum(e, axis=-1, keepdims=True)
    # Plain divide (tiny S2): portable across the interpret/CPU lowering path.
    sm = e / denom

    # Dropout: mask is pre-scaled (keep/(1-p)) and generated in the wrapper.
    dropped = sm * mask_ref[...]

    o_ref[...] = jnp.dot(dropped, v, preferred_element_type=jnp.float32).astype(o_ref.dtype)


def prepare_params(wq, bq, wk, bk, wv, bv):
    """One-time parameter prep (hoisted out of the hot path).

    PyTorch nn.Linear stores W as (out, in); transpose so the kernel computes
    x @ W + b.  Fold the 1/0.06 scale into the query projection, and fuse the
    K and V projections into a single (H, 2H) weight / (1, 2H) bias.
    """
    H = wq.shape[0]
    wq_t = (wq.T * SCALE).astype(jnp.float32)                 # (H, H)
    bq2 = (bq * SCALE).reshape(1, H).astype(jnp.float32)      # (1, H)
    wkv_t = jnp.concatenate([wk.T, wv.T], axis=1).astype(jnp.float32)   # (H, 2H)
    bkv2 = jnp.concatenate([bk, bv]).reshape(1, 2 * H).astype(jnp.float32)
    return wq_t, bq2, wkv_t, bkv2


@jax.jit
def attention_forward(x1, x2, params, dropout_key):
    wq_t, bq2, wkv_t, bkv2 = params
    S1, H = x1.shape
    S2 = x2.shape[0]

    # Dropout mask (keep with prob 1-p, scaled by 1/(1-p)).  Generated with
    # jax.random so the kernel body has no TPU-only PRNG primitives.
    keep = jax.random.bernoulli(dropout_key, 1.0 - P_DROP, (S1, S2))
    mask = keep.astype(jnp.float32) * (1.0 / (1.0 - P_DROP))

    full = lambda shape: pl.BlockSpec(shape, lambda i: (0, 0))

    return pl.pallas_call(
        attn_kernel,
        out_shape=jax.ShapeDtypeStruct((S1, H), jnp.float32),
        grid=(1,),
        in_specs=[
            full((S1, H)),        # x1
            full((S2, H)),        # x2
            full((H, H)),         # Wq^T * SCALE
            full((1, H)),         # bq * SCALE
            full((H, 2 * H)),     # [Wk^T | Wv^T]
            full((1, 2 * H)),     # [bk | bv]
            full((S1, S2)),       # dropout mask (pre-scaled)
        ],
        out_specs=full((S1, H)),
        compiler_params=pltpu.CompilerParams(
            dimension_semantics=("arbitrary",)),
    )(x1, x2, wq_t, bq2, wkv_t, bkv2, mask)


if __name__ == "__main__":
    # Small shapes consistent with the module: seq=8, hidden=128.
    S, H = 8, 128
    key = jax.random.PRNGKey(0)
    (k_x1, k_x2, k_wq, k_bq, k_wk, k_bk, k_wv, k_bv, k_drop) = jax.random.split(key, 9)

    x1 = jax.random.normal(k_x1, (S, H), dtype=jnp.float32)
    x2 = jax.random.normal(k_x2, (S, H), dtype=jnp.float32)

    # Deterministic parameter init (PyTorch Linear-style uniform bound).
    bound = 1.0 / (H ** 0.5)
    wq = jax.random.uniform(k_wq, (H, H), jnp.float32, -bound, bound)
    bq = jax.random.uniform(k_bq, (H,),   jnp.float32, -bound, bound)
    wk = jax.random.uniform(k_wk, (H, H), jnp.float32, -bound, bound)
    bk = jax.random.uniform(k_bk, (H,),   jnp.float32, -bound, bound)
    wv = jax.random.uniform(k_wv, (H, H), jnp.float32, -bound, bound)
    bv = jax.random.uniform(k_bv, (H,),   jnp.float32, -bound, bound)

    # One-time weight prep (transpose / fuse / scale-fold) outside the hot path.
    params = prepare_params(wq, bq, wk, bk, wv, bv)

    out = attention_forward(x1, x2, params, k_drop)
    jax.block_until_ready(out)
    assert out.shape == (S, H)
    assert bool(jnp.all(jnp.isfinite(out)))
    print("KERNEL_OK")
</pallas_src>

<mosaic_0001>
module attributes {stable_mosaic.version = 11 : i64} {
  func.func @attn_kernel(%arg0: i32, %arg1: memref<8x128xf32, #tpu.memory_space<vmem>>, %arg2: memref<8x128xf32, #tpu.memory_space<vmem>>, %arg3: memref<128x128xf32, #tpu.memory_space<vmem>>, %arg4: memref<1x128xf32, #tpu.memory_space<vmem>>, %arg5: memref<128x256xf32, #tpu.memory_space<vmem>>, %arg6: memref<1x256xf32, #tpu.memory_space<vmem>>, %arg7: memref<8x8xf32, #tpu.memory_space<vmem>>, %arg8: memref<8x128xf32, #tpu.memory_space<vmem>>) attributes {dimension_semantics = [#tpu.dimension_semantics<arbitrary>], iteration_bounds = array<i64: 1>, scalar_prefetch = 0 : i64, scratch_operands = 0 : i64, tpu.core_type = #tpu.core_type<tc>, window_params = [{pipeline_mode = #tpu.pipeline_mode<synchronous>, transform_indices = @transform_0, window_bounds = array<i64: 8, 128>}, {pipeline_mode = #tpu.pipeline_mode<synchronous>, transform_indices = @transform_1, window_bounds = array<i64: 8, 128>}, {pipeline_mode = #tpu.pipeline_mode<synchronous>, transform_indices = @transform_2, window_bounds = array<i64: 128, 128>}, {pipeline_mode = #tpu.pipeline_mode<synchronous>, transform_indices = @transform_3, window_bounds = array<i64: 1, 128>}, {pipeline_mode = #tpu.pipeline_mode<synchronous>, transform_indices = @transform_4, window_bounds = array<i64: 128, 256>}, {pipeline_mode = #tpu.pipeline_mode<synchronous>, transform_indices = @transform_5, window_bounds = array<i64: 1, 256>}, {pipeline_mode = #tpu.pipeline_mode<synchronous>, transform_indices = @transform_6, window_bounds = array<i64: 8, 8>}, {pipeline_mode = #tpu.pipeline_mode<synchronous>, transform_indices = @transform_7, window_bounds = array<i64: 8, 128>}]} {
    %c0 = arith.constant 0 : index
    %c0_0 = arith.constant 0 : index
    %0 = vector.load %arg1[%c0, %c0_0] : memref<8x128xf32, #tpu.memory_space<vmem>>, vector<8x128xf32>
    %c0_1 = arith.constant 0 : index
    %c0_2 = arith.constant 0 : index
    %1 = vector.load %arg3[%c0_1, %c0_2] : memref<128x128xf32, #tpu.memory_space<vmem>>, vector<128x128xf32>
    %cst = arith.constant dense<0.000000e+00> : vector<8x128xf32>
    %2 = tpu.matmul %0, %1, %cst {dimension_numbers = #tpu.dot_dimension_numbers<[1], [0], [0], [1], [0, 0, 1, 1], [], []>} : vector<8x128xf32>, vector<128x128xf32>, vector<8x128xf32> -> vector<8x128xf32>
    %c0_3 = arith.constant 0 : index
    %c0_4 = arith.constant 0 : index
    %3 = vector.load %arg4[%c0_3, %c0_4] : memref<1x128xf32, #tpu.memory_space<vmem>>, vector<1x128xf32>
    %4 = vector.broadcast %3 : vector<1x128xf32> to vector<8x128xf32>
    %5 = arith.addf %2, %4 : vector<8x128xf32>
    %c0_5 = arith.constant 0 : index
    %c0_6 = arith.constant 0 : index
    %6 = vector.load %arg2[%c0_5, %c0_6] : memref<8x128xf32, #tpu.memory_space<vmem>>, vector<8x128xf32>
    %c0_7 = arith.constant 0 : index
    %c0_8 = arith.constant 0 : index
    %7 = vector.load %arg5[%c0_7, %c0_8] : memref<128x256xf32, #tpu.memory_space<vmem>>, vector<128x256xf32>
    %cst_9 = arith.constant dense<0.000000e+00> : vector<8x256xf32>
    %8 = tpu.matmul %6, %7, %cst_9 {dimension_numbers = #tpu.dot_dimension_numbers<[1], [0], [0], [1], [0, 0, 1, 1], [], []>} : vector<8x128xf32>, vector<128x256xf32>, vector<8x256xf32> -> vector<8x256xf32>
    %c0_10 = arith.constant 0 : index
    %c0_11 = arith.constant 0 : index
    %9 = vector.load %arg6[%c0_10, %c0_11] : memref<1x256xf32, #tpu.memory_space<vmem>>, vector<1x256xf32>
    %10 = vector.broadcast %9 : vector<1x256xf32> to vector<8x256xf32>
    %11 = arith.addf %8, %10 : vector<8x256xf32>
    %12 = vector.extract_strided_slice %11 {offsets = [0, 0], sizes = [8, 128], strides = [1, 1]} : vector<8x256xf32> to vector<8x128xf32>
    %13 = vector.extract_strided_slice %11 {offsets = [0, 128], sizes = [8, 128], strides = [1, 1]} : vector<8x256xf32> to vector<8x128xf32>
    %cst_12 = arith.constant dense<0.000000e+00> : vector<8x8xf32>
    %14 = tpu.matmul %5, %12, %cst_12 {dimension_numbers = #tpu.dot_dimension_numbers<[1], [1], [0], [0], [0, 0, 1, 0], [], []>} : vector<8x128xf32>, vector<8x128xf32>, vector<8x8xf32> -> vector<8x8xf32>
    %cst_13 = arith.constant dense<0xFF800000> : vector<8xf32>
    %15 = vector.multi_reduction <maximumf>, %14, %cst_13 [1] : vector<8x8xf32> to vector<8xf32>
    %16 = vector.shape_cast %15 : vector<8xf32> to vector<8x1xf32>
    %17 = vector.broadcast %16 : vector<8x1xf32> to vector<8x8xf32>
    %18 = arith.subf %14, %17 : vector<8x8xf32>
    %19 = math.exp %18 : vector<8x8xf32>
    %cst_14 = arith.constant dense<0.000000e+00> : vector<8xf32>
    %20 = vector.multi_reduction <add>, %19, %cst_14 [1] : vector<8x8xf32> to vector<8xf32>
    %21 = vector.shape_cast %20 : vector<8xf32> to vector<8x1xf32>
    %22 = vector.broadcast %21 : vector<8x1xf32> to vector<8x8xf32>
    %23 = arith.divf %19, %22 : vector<8x8xf32>
    %c0_15 = arith.constant 0 : index
    %c0_16 = arith.constant 0 : index
    %24 = vector.load %arg7[%c0_15, %c0_16] : memref<8x8xf32, #tpu.memory_space<vmem>>, vector<8x8xf32>
    %25 = arith.mulf %23, %24 : vector<8x8xf32>
    %cst_17 = arith.constant dense<0.000000e+00> : vector<8x128xf32>
    %26 = tpu.matmul %25, %13, %cst_17 {dimension_numbers = #tpu.dot_dimension_numbers<[1], [0], [0], [1], [0, 0, 1, 1], [], []>} : vector<8x8xf32>, vector<8x128xf32>, vector<8x128xf32> -> vector<8x128xf32>
    %c0_18 = arith.constant 0 : index
    %c0_19 = arith.constant 0 : index
    %27 = vector.load %arg8[%c0_18, %c0_19] : memref<8x128xf32, #tpu.memory_space<vmem>>, vector<8x128xf32>
    tpu.vector_store %arg8[%c0_18, %c0_19], %26 {strides = array<i32>} : memref<8x128xf32, #tpu.memory_space<vmem>>, vector<8x128xf32>,
    return
  }
  func.func @transform_0(%arg0: i32) -> (i32, i32) {
    %c0_i32 = arith.constant 0 : i32
    %c0_i32_0 = arith.constant 0 : i32
    %c0_i32_1 = arith.constant 0 : i32
    return %c0_i32, %c0_i32_0 : i32, i32
  }
  func.func @transform_1(%arg0: i32) -> (i32, i32) {
    %c0_i32 = arith.constant 0 : i32
    %c0_i32_0 = arith.constant 0 : i32
    %c0_i32_1 = arith.constant 0 : i32
    return %c0_i32, %c0_i32_0 : i32, i32
  }
  func.func @transform_2(%arg0: i32) -> (i32, i32) {
    %c0_i32 = arith.constant 0 : i32
    %c0_i32_0 = arith.constant 0 : i32
    %c0_i32_1 = arith.constant 0 : i32
    return %c0_i32, %c0_i32_0 : i32, i32
  }
  func.func @transform_3(%arg0: i32) -> (i32, i32) {
    %c0_i32 = arith.constant 0 : i32
    %c0_i32_0 = arith.constant 0 : i32
    %c0_i32_1 = arith.constant 0 : i32
    return %c0_i32, %c0_i32_0 : i32, i32
  }
  func.func @transform_4(%arg0: i32) -> (i32, i32) {
    %c0_i32 = arith.constant 0 : i32
    %c0_i32_0 = arith.constant 0 : i32
    %c0_i32_1 = arith.constant 0 : i32
    return %c0_i32, %c0_i32_0 : i32, i32
  }
  func.func @transform_5(%arg0: i32) -> (i32, i32) {
    %c0_i32 = arith.constant 0 : i32
    %c0_i32_0 = arith.constant 0 : i32
    %c0_i32_1 = arith.constant 0 : i32
    return %c0_i32, %c0_i32_0 : i32, i32
  }
  func.func @transform_6(%arg0: i32) -> (i32, i32) {
    %c0_i32 = arith.constant 0 : i32
    %c0_i32_0 = arith.constant 0 : i32
    %c0_i32_1 = arith.constant 0 : i32
    return %c0_i32, %c0_i32_0 : i32, i32
  }
  func.func @transform_7(%arg0: i32) -> (i32, i32) {
    %c0_i32 = arith.constant 0 : i32
    %c0_i32_0 = arith.constant 0 : i32
    %c0_i32_1 = arith.constant 0 : i32
    return %c0_i32, %c0_i32_0 : i32, i32
  }
}

</mosaic_0001>

<llo_original>
// kernel: attention_forward.1
$region0: #{attention_forward.1}
  #allocation0 [shape = 'u32[]', space=smem, size = 0x4, offset = 0x4, fixed_abs, tag = 'smem constant byte address 0x4 - core index']
  #allocation1 [shape = 'u32[144,128]{1,0:T(1,128)}', space=vmem, size = 0x12000, scoped, tag = 'internal scratch']
  %s0 = inlined_call_operand.vmem [shape: f32[8,128], index: 0, kind: input, shape index: {}]
  %s1 = inlined_call_operand.vmem [shape: f32[8,128], index: 1, kind: input, shape index: {}]
  %s2 = inlined_call_operand.hbm [shape: f32[128,128], index: 2, kind: input, shape index: {}]
  %s3 = inlined_call_operand.vmem [shape: f32[1,128], index: 3, kind: input, shape index: {}]
  %s4 = inlined_call_operand.hbm [shape: f32[128,256], index: 4, kind: input, shape index: {}]
  %s5 = inlined_call_operand.vmem [shape: f32[1,256], index: 5, kind: input, shape index: {}]
  %s6 = inlined_call_operand.vmem [shape: f32[8,8], index: 6, kind: input, shape index: {}]
  %s7 = inlined_call_operand.hbm [shape: f32[8,128], index: 7, kind: output, shape index: {}]
  %s8 = sld [smem:[#allocation0]]
  $region46: #{attention_forward.1} parent=0
    _
  %s10 = ssub.s32 1, %s8
  %s11 = scalar_select 0, %s10, %s8
  $region1: #{attention_forward.1} parent=0
    #allocation2 [shape = 'u8[65536]{0}', space=vmem, size = 0x10000, scoped, tag = 'input window, operand 2, single buffered']
    #allocation3 [shape = 's32[1]{0}', space=sflag, size = 0x4, scoped, tag = 'scoped memory for attention_forward.1']
    #allocation4 [shape = 's32[1]{0}', space=sflag, size = 0x4, scoped, tag = 'scoped memory for attention_forward.1']
    #allocation5 [shape = 'u8[131072]{0}', space=vmem, size = 0x20000, scoped, tag = 'input window, operand 4, single buffered']
    #allocation6 [shape = 's32[1]{0}', space=sflag, size = 0x4, scoped, tag = 'scoped memory for attention_forward.1']
    #allocation7 [shape = 'u8[4096]{0}', space=vmem, size = 0x1000, scoped, tag = 'output window, operand 0, single buffered']
    %12 = vsyncpa [#allocation3], 0
    %13 = vsyncpa [#allocation6], 0
    %14 = vsyncpa [#allocation4], 0
    // Predicated region
    $region2: #{attention_forward.1} parent=1 // pred_check
      _
    $region3: #{attention_forward.1} parent=1 // pred_check_branch
      %16 = sbr.rel (0) target = $region5
    $region4: #{attention_forward.1} parent=1 // pred_region
      _
    $region5: #{attention_forward.1} parent=1 // pred_fallthru
      _
    // Predicated region
    $region6: #{attention_forward.1} parent=1 // pred_check
      _
    $region7: #{attention_forward.1} parent=1 // pred_check_branch
      %18 = sbr.rel (0) target = $region9
    $region8: #{attention_forward.1} parent=1 // pred_region
      _
    $region9: #{attention_forward.1} parent=1 // pred_fallthru
      _
    // Predicated region
    $region10: #{attention_forward.1} parent=1 // pred_check
      _
    $region11: #{attention_forward.1} parent=1 // pred_check_branch
      %20 = sbr.rel (0) target = $region13
    $region12: #{attention_forward.1} parent=1 // pred_region
      %s22 = ssub.s32 2048, 2048
      %23 = vsyncadd [#allocation3], %s22
      %s24 = sshll.u32 [#allocation2], 4
      %s25 = int_to_ptr.vmem [resolvable:$true] %s24
      %30 = dma.hbm_to_vmem [thread:$0]  %s2, 2048, %s25, [#allocation3], 128, 128, 8
    $region13: #{attention_forward.1} parent=1 // pred_fallthru
      _
    // Predicated region
    $region14: #{attention_forward.1} parent=1 // pred_check
      _
    $region15: #{attention_forward.1} parent=1 // pred_check_branch
      %32 = sbr.rel (0) target = $region17
    $region16: #{attention_forward.1} parent=1 // pred_region
      _
    $region17: #{attention_forward.1} parent=1 // pred_fallthru
      _
    // Predicated region
    $region18: #{attention_forward.1} parent=1 // pred_check
      _
    $region19: #{attention_forward.1} parent=1 // pred_check_branch
      %34 = sbr.rel (0) target = $region21
    $region20: #{attention_forward.1} parent=1 // pred_region
      %s36 = ssub.s32 4096, 4096
      %37 = vsyncadd [#allocation6], %s36
      %s38 = sshll.u32 [#allocation5], 4
      %s39 = int_to_ptr.vmem [resolvable:$true] %s38
      %44 = dma.hbm_to_vmem [thread:$0]  %s4, 4096, %s39, [#allocation6], 256, 256, 16
    $region21: #{attention_forward.1} parent=1 // pred_fallthru
      _
    // Predicated region
    $region22: #{attention_forward.1} parent=1 // pred_check
      _
    $region23: #{attention_forward.1} parent=1 // pred_check_branch
      %46 = sbr.rel (0) target = $region25
    $region24: #{attention_forward.1} parent=1 // pred_region
      _
    $region25: #{attention_forward.1} parent=1 // pred_fallthru
      _
    // Predicated region
    $region26: #{attention_forward.1} parent=1 // pred_check
      _
    $region27: #{attention_forward.1} parent=1 // pred_check_branch
      %48 = sbr.rel (0) target = $region29
    $region28: #{attention_forward.1} parent=1 // pred_region
      _
    $region29: #{attention_forward.1} parent=1 // pred_fallthru
      _
    // Predicated region
    $region30: #{attention_forward.1} parent=1 // pred_check
      _
    $region31: #{attention_forward.1} parent=1 // pred_check_branch
      %50 = sbr.rel (0) target = $region33
    $region32: #{attention_forward.1} parent=1 // pred_region
      %51 = dma.done [#allocation3], 2048
    $region33: #{attention_forward.1} parent=1 // pred_fallthru
      _
    // Predicated region
    $region34: #{attention_forward.1} parent=1 // pred_check
      _
    $region35: #{attention_forward.1} parent=1 // pred_check_branch
      %53 = sbr.rel (0) target = $region37
    $region36: #{attention_forward.1} parent=1 // pred_region
      %54 = dma.done [#allocation6], 4096
    $region37: #{attention_forward.1} parent=1 // pred_fallthru
      _
    %v55 = vld [vmem:[%s0] sm:$0xff]
    %v56 = vld [vmem:[#allocation2] sm:$0xff]
    %v57 = vld [vmem:[#allocation2 + $0x8] sm:$0xff]
    %v58 = vld [vmem:[#allocation2 + $0x10] sm:$0xff]
    %v59 = vld [vmem:[#allocation2 + $0x18] sm:$0xff]
    %v60 = vld [vmem:[#allocation2 + $0x20] sm:$0xff]
    %v61 = vld [vmem:[#allocation2 + $0x28] sm:$0xff]
    %v62 = vld [vmem:[#allocation2 + $0x30] sm:$0xff]
    %v63 = vld [vmem:[#allocation2 + $0x38] sm:$0xff]
    %v64 = vld [vmem:[#allocation2 + $0x40] sm:$0xff]
    %v65 = vld [vmem:[#allocation2 + $0x48] sm:$0xff]
    %v66 = vld [vmem:[#allocation2 + $0x50] sm:$0xff]
    %v67 = vld [vmem:[#allocation2 + $0x58] sm:$0xff]
    %v68 = vld [vmem:[#allocation2 + $0x60] sm:$0xff]
    %v69 = vld [vmem:[#allocation2 + $0x68] sm:$0xff]
    %v70 = vld [vmem:[#allocation2 + $0x70] sm:$0xff]
    %v71 = vld [vmem:[#allocation2 + $0x78] sm:$0xff]
    %v72 = vld [vmem:[%s3] sm:$0x1]
    %v74 = vlaneseq
    %v75 = vshrl.u32 %v74, 7
    %v76 = vsub.s32 0, %v75
    %v77 = vrot.slane %v72, %v76
    %79 = vmatprep.subr.mxu0 0.0
    %80 = vmatpush1.msra.mxu0 %v56
    %81 = vmatprep.subr.mxu0 0.0
    %82 = vmatpush1.msra.mxu0 %v57
    %83 = vmatprep.subr.mxu0 0.0
    %84 = vmatpush1.msra.mxu0 %v58
    %85 = vmatprep.subr.mxu0 0.0
    %86 = vmatpush1.msra.mxu0 %v59
    %87 = vmatprep.subr.mxu0 0.0
    %88 = vmatpush1.msra.mxu0 %v60
    %89 = vmatprep.subr.mxu0 0.0
    %90 = vmatpush1.msra.mxu0 %v61
    %91 = vmatprep.subr.mxu0 0.0
    %92 = vmatpush1.msra.mxu0 %v62
    %93 = vmatprep.subr.mxu0 0.0
    %94 = vmatpush1.msra.mxu0 %v63
    %95 = vmatprep.subr.mxu0 0.0
    %96 = vmatpush1.msra.mxu0 %v64
    %97 = vmatprep.subr.mxu0 0.0
    %98 = vmatpush1.msra.mxu0 %v65
    %99 = vmatprep.subr.mxu0 0.0
    %100 = vmatpush1.msra.mxu0 %v66
    %101 = vmatprep.subr.mxu0 0.0
    %102 = vmatpush1.msra.mxu0 %v67
    %103 = vmatprep.subr.mxu0 0.0
    %104 = vmatpush1.msra.mxu0 %v68
    %105 = vmatprep.subr.mxu0 0.0
    %106 = vmatpush1.msra.mxu0 %v69
    %107 = vmatprep.subr.mxu0 0.0
    %108 = vmatpush1.msra.mxu0 %v70
    %109 = vmatprep.subr.mxu0 0.0
    %110 = vmatpush1.msra.mxu0 %v71
    %111 = vmatprep.subr.mxu0 0.0
    %112 = vmatpush1.msra.mxu0 0.0
    %113 = vmatprep.subr.mxu0 0.0
    %114 = vmatpush1.msra.mxu0 0.0
    %115 = vmatprep.subr.mxu0 0.0
    %116 = vmatpush1.msra.mxu0 0.0
    %117 = vmatprep.subr.mxu0 0.0
    %118 = vmatpush1.msra.mxu0 0.0
    %119 = vmatprep.subr.mxu0 0.0
    %120 = vmatpush1.msra.mxu0 0.0
    %121 = vmatprep.subr.mxu0 0.0
    %122 = vmatpush1.msra.mxu0 0.0
    %123 = vmatprep.subr.mxu0 0.0
    %124 = vmatpush1.msra.mxu0 0.0
    %125 = vmatprep.subr.mxu0 0.0
    %126 = vmatpush1.msra.mxu0 0.0
    %127 = vmatprep.subr.mxu0 0.0
    %128 = vmatpush1.msra.mxu0 0.0
    %129 = vmatprep.subr.mxu0 0.0
    %130 = vmatpush1.msra.mxu0 0.0
    %131 = vmatprep.subr.mxu0 0.0
    %132 = vmatpush1.msra.mxu0 0.0
    %133 = vmatprep.subr.mxu0 0.0
    %134 = vmatpush1.msra.mxu0 0.0
    %135 = vmatprep.subr.mxu0 0.0
    %136 = vmatpush1.msra.mxu0 0.0
    %137 = vmatprep.subr.mxu0 0.0
    %138 = vmatpush1.msra.mxu0 0.0
    %139 = vmatprep.subr.mxu0 0.0
    %140 = vmatpush1.msra.mxu0 0.0
    %141 = vmatprep.subr.mxu0 0.0
    %142 = vmatpush1.msra.mxu0 0.0
    %143 = vmatprep.mubr.f32.mxu0 0.0
    %144 = vmatmul.mubr.f32.gmra.mrb[0].mxu0 %v55
    %v145 = vpop.f32.mrb[0].mxu0
    %v146 = vadd.f32 %v77, %v145
    %v147 = vpop.f32.mrb[0].mxu0
    %148 = vdwg.mxu0
    %v149 = vld [vmem:[%s1] sm:$0xff]
    %v150 = vld [vmem:[#allocation5] sm:$0xff]
    %v151 = vld [vmem:[#allocation5 + $0x8] sm:$0xff]
    %v152 = vld [vmem:[#allocation5 + $0x10] sm:$0xff]
    %v153 = vld [vmem:[#allocation5 + $0x18] sm:$0xff]
    %v154 = vld [vmem:[#allocation5 + $0x20] sm:$0xff]
    %v155 = vld [vmem:[#allocation5 + $0x28] sm:$0xff]
    %v156 = vld [vmem:[#allocation5 + $0x30] sm:$0xff]
    %v157 = vld [vmem:[#allocation5 + $0x38] sm:$0xff]
    %v158 = vld [vmem:[#allocation5 + $0x40] sm:$0xff]
    %v159 = vld [vmem:[#allocation5 + $0x48] sm:$0xff]
    %v160 = vld [vmem:[#allocation5 + $0x50] sm:$0xff]
    %v161 = vld [vmem:[#allocation5 + $0x58] sm:$0xff]
    %v162 = vld [vmem:[#allocation5 + $0x60] sm:$0xff]
    %v163 = vld [vmem:[#allocation5 + $0x68] sm:$0xff]
    %v164 = vld [vmem:[#allocation5 + $0x70] sm:$0xff]
    %v165 = vld [vmem:[#allocation5 + $0x78] sm:$0xff]
    %v166 = vld [vmem:[#allocation5 + $0x80] sm:$0xff]
    %v167 = vld [vmem:[#allocation5 + $0x88] sm:$0xff]
    %v168 = vld [vmem:[#allocation5 + $0x90] sm:$0xff]
    %v169 = vld [vmem:[#allocation5 + $0x98] sm:$0xff]
    %v170 = vld [vmem:[#allocation5 + $0xa0] sm:$0xff]
    %v171 = vld [vmem:[#allocation5 + $0xa8] sm:$0xff]
    %v172 = vld [vmem:[#allocation5 + $0xb0] sm:$0xff]
    %v173 = vld [vmem:[#allocation5 + $0xb8] sm:$0xff]
    %v174 = vld [vmem:[#allocation5 + $0xc0] sm:$0xff]
    %v175 = vld [vmem:[#allocation5 + $0xc8] sm:$0xff]
    %v176 = vld [vmem:[#allocation5 + $0xd0] sm:$0xff]
    %v177 = vld [vmem:[#allocation5 + $0xd8] sm:$0xff]
    %v178 = vld [vmem:[#allocation5 + $0xe0] sm:$0xff]
    %v179 = vld [vmem:[#allocation5 + $0xe8] sm:$0xff]
    %v180 = vld [vmem:[#allocation5 + $0xf0] sm:$0xff]
    %v181 = vld [vmem:[#allocation5 + $0xf8] sm:$0xff]
    %v182 = vld [vmem:[%s5] sm:$0x3]
    %v184 = vlaneseq
    %v185 = vshrl.u32 %v184, 7
    %v186 = vsub.s32 0, %v185
    %v187 = vrot.slane %v182, %v186
    %v188 = vlaneseq
    %v189 = vshrl.u32 %v188, 7
    %v190 = vsub.s32 1, %v189
    %v191 = vrot.slane %v182, %v190
    %194 = vmatprep.subr.mxu0 %v151
    %195 = vmatpush1.msra.mxu0 %v150
    %196 = vmatprep.subr.mxu0 %v153
    %197 = vmatpush1.msra.mxu0 %v152
    %198 = vmatprep.subr.mxu0 %v155
    %199 = vmatpush1.msra.mxu0 %v154
    %200 = vmatprep.subr.mxu0 %v157
    %201 = vmatpush1.msra.mxu0 %v156
    %202 = vmatprep.subr.mxu0 %v159
    %203 = vmatpush1.msra.mxu0 %v158
    %204 = vmatprep.subr.mxu0 %v161
    %205 = vmatpush1.msra.mxu0 %v160
    %206 = vmatprep.subr.mxu0 %v163
    %207 = vmatpush1.msra.mxu0 %v162
    %208 = vmatprep.subr.mxu0 %v165
    %209 = vmatpush1.msra.mxu0 %v164
    %210 = vmatprep.subr.mxu0 %v167
    %211 = vmatpush1.msra.mxu0 %v166
    %212 = vmatprep.subr.mxu0 %v169
    %213 = vmatpush1.msra.mxu0 %v168
    %214 = vmatprep.subr.mxu0 %v171
    %215 = vmatpush1.msra.mxu0 %v170
    %216 = vmatprep.subr.mxu0 %v173
    %217 = vmatpush1.msra.mxu0 %v172
    %218 = vmatprep.subr.mxu0 %v175
    %219 = vmatpush1.msra.mxu0 %v174
    %220 = vmatprep.subr.mxu0 %v177
    %221 = vmatpush1.msra.mxu0 %v176
    %222 = vmatprep.subr.mxu0 %v179
    %223 = vmatpush1.msra.mxu0 %v178
    %224 = vmatprep.subr.mxu0 %v181
    %225 = vmatpush1.msra.mxu0 %v180
    %226 = vmatprep.subr.mxu0 0.0
    %227 = vmatpush1.msra.mxu0 0.0
    %228 = vmatprep.subr.mxu0 0.0
    %229 = vmatpush1.msra.mxu0 0.0
    %230 = vmatprep.subr.mxu0 0.0
    %231 = vmatpush1.msra.mxu0 0.0
    %232 = vmatprep.subr.mxu0 0.0
    %233 = vmatpush1.msra.mxu0 0.0
    %234 = vmatprep.subr.mxu0 0.0
    %235 = vmatpush1.msra.mxu0 0.0
    %236 = vmatprep.subr.mxu0 0.0
    %237 = vmatpush1.msra.mxu0 0.0
    %238 = vmatprep.subr.mxu0 0.0
    %239 = vmatpush1.msra.mxu0 0.0
    %240 = vmatprep.subr.mxu0 0.0
    %241 = vmatpush1.msra.mxu0 0.0
    %242 = vmatprep.subr.mxu0 0.0
    %243 = vmatpush1.msra.mxu0 0.0
    %244 = vmatprep.subr.mxu0 0.0
    %245 = vmatpush1.msra.mxu0 0.0
    %246 = vmatprep.subr.mxu0 0.0
    %247 = vmatpush1.msra.mxu0 0.0
    %248 = vmatprep.subr.mxu0 0.0
    %249 = vmatpush1.msra.mxu0 0.0
    %250 = vmatprep.subr.mxu0 0.0
    %251 = vmatpush1.msra.mxu0 0.0
    %252 = vmatprep.subr.mxu0 0.0
    %253 = vmatpush1.msra.mxu0 0.0
    %254 = vmatprep.subr.mxu0 0.0
    %255 = vmatpush1.msra.mxu0 0.0
    %256 = vmatprep.subr.mxu0 0.0
    %257 = vmatpush1.msra.mxu0 0.0
    %258 = vmatprep.mubr.f32.mxu0 0.0
    %259 = vmatmul.mubr.f32.gmra.mrb[0].mxu0 %v149
    %v260 = vpop.f32.mrb[0].mxu0
    %v261 = vadd.f32 %v187, %v260
    %v262 = vpop.f32.mrb[0].mxu0
    %v263 = vadd.f32 %v191, %v262
    %264 = vdwg.mxu0
    %265 = vmatprep.subr.mxu0 0.0
    %266 = vmatpush1.xpose.msra.mxu0 %v261
    %267 = vmatprep.subr.mxu0 0.0
    %268 = vmatpush1.xpose.msra.mxu0 0.0
    %269 = vmatprep.subr.mxu0 0.0
    %270 = vmatpush1.xpose.msra.mxu0 0.0
    %271 = vmatprep.subr.mxu0 0.0
    %272 = vmatpush1.xpose.msra.mxu0 0.0
    %273 = vmatprep.subr.mxu0 0.0
    %274 = vmatpush1.xpose.msra.mxu0 0.0
    %275 = vmatprep.subr.mxu0 0.0
    %276 = vmatpush1.xpose.msra.mxu0 0.0
    %277 = vmatprep.subr.mxu0 0.0
    %278 = vmatpush1.xpose.msra.mxu0 0.0
    %279 = vmatprep.subr.mxu0 0.0
    %280 = vmatpush1.xpose.msra.mxu0 0.0
    %281 = vmatprep.subr.mxu0 0.0
    %282 = vmatpush1.xpose.msra.mxu0 0.0
    %283 = vmatprep.subr.mxu0 0.0
    %284 = vmatpush1.xpose.msra.mxu0 0.0
    %285 = vmatprep.subr.mxu0 0.0
    %286 = vmatpush1.xpose.msra.mxu0 0.0
    %287 = vmatprep.subr.mxu0 0.0
    %288 = vmatpush1.xpose.msra.mxu0 0.0
    %289 = vmatprep.subr.mxu0 0.0
    %290 = vmatpush1.xpose.msra.mxu0 0.0
    %291 = vmatprep.subr.mxu0 0.0
    %292 = vmatpush1.xpose.msra.mxu0 0.0
    %293 = vmatprep.subr.mxu0 0.0
    %294 = vmatpush1.xpose.msra.mxu0 0.0
    %295 = vmatprep.subr.mxu0 0.0
    %296 = vmatpush1.xpose.msra.mxu0 0.0
    %297 = vmatprep.subr.mxu0 0.0
    %298 = vmatpush1.xpose.msra.mxu0 0.0
    %299 = vmatprep.subr.mxu0 0.0
    %300 = vmatpush1.xpose.msra.mxu0 0.0
    %301 = vmatprep.subr.mxu0 0.0
    %302 = vmatpush1.xpose.msra.mxu0 0.0
    %303 = vmatprep.subr.mxu0 0.0
    %304 = vmatpush1.xpose.msra.mxu0 0.0
    %305 = vmatprep.subr.mxu0 0.0
    %306 = vmatpush1.xpose.msra.mxu0 0.0
    %307 = vmatprep.subr.mxu0 0.0
    %308 = vmatpush1.xpose.msra.mxu0 0.0
    %309 = vmatprep.subr.mxu0 0.0
    %310 = vmatpush1.xpose.msra.mxu0 0.0
    %311 = vmatprep.subr.mxu0 0.0
    %312 = vmatpush1.xpose.msra.mxu0 0.0
    %313 = vmatprep.subr.mxu0 0.0
    %314 = vmatpush1.xpose.msra.mxu0 0.0
    %315 = vmatprep.subr.mxu0 0.0
    %316 = vmatpush1.xpose.msra.mxu0 0.0
    %317 = vmatprep.subr.mxu0 0.0
    %318 = vmatpush1.xpose.msra.mxu0 0.0
    %319 = vmatprep.subr.mxu0 0.0
    %320 = vmatpush1.xpose.msra.mxu0 0.0
    %321 = vmatprep.subr.mxu0 0.0
    %322 = vmatpush1.xpose.msra.mxu0 0.0
    %323 = vmatprep.subr.mxu0 0.0
    %324 = vmatpush1.xpose.msra.mxu0 0.0
    %325 = vmatprep.subr.mxu0 0.0
    %326 = vmatpush1.xpose.msra.mxu0 0.0
    %327 = vmatprep.subr.mxu0 0.0
    %328 = vmatpush1.xpose.msra.mxu0 0.0
    %329 = vmatprep.mubr.f32.mxu0 0.0
    %330 = vmatmul.mubr.f32.gmra.mrb[0].mxu0 %v146
    %v331 = vpop.f32.mrb[0].mxu0
    %v332 = vadd.f32 0.0, %v331
    %v333 = vpop.f32.mrb[0].mxu0
    %334 = vdwg.mxu0
    %vm335 = vcmask 64512
    %v336 = vsel %vm335, %v332, -inf
    %337 = vmax.xlane.f32.xlu0 %v336
    %v338 = vpop.xlane.xlu0 %337
    %v339 = vsub.f32 %v332, %v338
    %v340 = vmul.f32 %v339, 1.442695
    %v341 = vpow.pop %v340
    %v342 = vsel %vm335, %v341, 0.0
    %343 = vadd.xlane.f32.xlu0 %v342
    %v344 = vpop.xlane.xlu0 %343
    %v345 = vrcp.pop %v344
    %v346 = vmul.f32 %v341, %v345
    %v347 = vld [vmem:[%s6] sm:$0xff]
    %v348 = vmul.f32 %v346, %v347
    %v350 = vsel %vm335, %v348, 0
    %352 = vmatprep.subr.mxu0 0.0
    %353 = vmatpush1.msra.mxu0 %v263
    %354 = vmatprep.subr.mxu0 0.0
    %355 = vmatpush1.msra.mxu0 0.0
    %356 = vmatprep.subr.mxu0 0.0
    %357 = vmatpush1.msra.mxu0 0.0
    %358 = vmatprep.subr.mxu0 0.0
    %359 = vmatpush1.msra.mxu0 0.0
    %360 = vmatprep.subr.mxu0 0.0
    %361 = vmatpush1.msra.mxu0 0.0
    %362 = vmatprep.subr.mxu0 0.0
    %363 = vmatpush1.msra.mxu0 0.0
    %364 = vmatprep.subr.mxu0 0.0
    %365 = vmatpush1.msra.mxu0 0.0
    %366 = vmatprep.subr.mxu0 0.0
    %367 = vmatpush1.msra.mxu0 0.0
    %368 = vmatprep.subr.mxu0 0.0
    %369 = vmatpush1.msra.mxu0 0.0
    %370 = vmatprep.subr.mxu0 0.0
    %371 = vmatpush1.msra.mxu0 0.0
    %372 = vmatprep.subr.mxu0 0.0
    %373 = vmatpush1.msra.mxu0 0.0
    %374 = vmatprep.subr.mxu0 0.0
    %375 = vmatpush1.msra.mxu0 0.0
    %376 = vmatprep.subr.mxu0 0.0
    %377 = vmatpush1.msra.mxu0 0.0
    %378 = vmatprep.subr.mxu0 0.0
    %379 = vmatpush1.msra.mxu0 0.0
    %380 = vmatprep.subr.mxu0 0.0
    %381 = vmatpush1.msra.mxu0 0.0
    %382 = vmatprep.subr.mxu0 0.0
    %383 = vmatpush1.msra.mxu0 0.0
    %384 = vmatprep.subr.mxu0 0.0
    %385 = vmatpush1.msra.mxu0 0.0
    %386 = vmatprep.subr.mxu0 0.0
    %387 = vmatpush1.msra.mxu0 0.0
    %388 = vmatprep.subr.mxu0 0.0
    %389 = vmatpush1.msra.mxu0 0.0
    %390 = vmatprep.subr.mxu0 0.0
    %391 = vmatpush1.msra.mxu0 0.0
    %392 = vmatprep.subr.mxu0 0.0
    %393 = vmatpush1.msra.mxu0 0.0
    %394 = vmatprep.subr.mxu0 0.0
    %395 = vmatpush1.msra.mxu0 0.0
    %396 = vmatprep.subr.mxu0 0.0
    %397 = vmatpush1.msra.mxu0 0.0
    %398 = vmatprep.subr.mxu0 0.0
    %399 = vmatpush1.msra.mxu0 0.0
    %400 = vmatprep.subr.mxu0 0.0
    %401 = vmatpush1.msra.mxu0 0.0
    %402 = vmatprep.subr.mxu0 0.0
    %403 = vmatpush1.msra.mxu0 0.0
    %404 = vmatprep.subr.mxu0 0.0
    %405 = vmatpush1.msra.mxu0 0.0
    %406 = vmatprep.subr.mxu0 0.0
    %407 = vmatpush1.msra.mxu0 0.0
    %408 = vmatprep.subr.mxu0 0.0
    %409 = vmatpush1.msra.mxu0 0.0
    %410 = vmatprep.subr.mxu0 0.0
    %411 = vmatpush1.msra.mxu0 0.0
    %412 = vmatprep.subr.mxu0 0.0
    %413 = vmatpush1.msra.mxu0 0.0
    %414 = vmatprep.subr.mxu0 0.0
    %415 = vmatpush1.msra.mxu0 0.0
    %416 = vmatprep.mubr.f32.mxu0 0.0
    %417 = vmatmul.mubr.f32.gmra.mrb[0].mxu0 %v350
    %v418 = vpop.f32.mrb[0].mxu0
    %v419 = vadd.f32 0.0, %v418
    %v420 = vpop.f32.mrb[0].mxu0
    %421 = vdwg.mxu0
    %422 = vst [vmem:[#allocation7] sm:$0xff] %v419
    // Predicated region
    $region38: #{attention_forward.1} parent=1 // pred_check
      _
    $region39: #{attention_forward.1} parent=1 // pred_check_branch
      %424 = sbr.rel (0) target = $region41
    $region40: #{attention_forward.1} parent=1 // pred_region
      %s426 = ssub.s32 128, 128
      %427 = vsyncadd [#allocation4], %s426
      %s429 = sshll.u32 [#allocation7], 4
      %s430 = int_to_ptr.vmem [resolvable:$true] %s429
      %432 = dma.vmem_to_hbm [thread:$0]  %s430, 128, %s7, [#allocation4]
    $region41: #{attention_forward.1} parent=1 // pred_fallthru
      _
    // Predicated region
    $region42: #{attention_forward.1} parent=1 // pred_check
      _
    $region43: #{attention_forward.1} parent=1 // pred_check_branch
      %434 = sbr.rel (0) target = $region45
    $region44: #{attention_forward.1} parent=1 // pred_region
      %435 = dma.done [#allocation4], 128
    $region45: #{attention_forward.1} parent=1 // pred_fallthru
      _
    %436 = vsyncpa [#allocation3], 1
    %437 = vsyncpa [#allocation6], 1
    %438 = vsyncpa [#allocation4], 1

</llo_original>
